<compile_context>
chip_gen: v5e
topology: v5e:2x2
jax: 0.10.0
libtpu: 0.0.40
codegen_flags: <defaults>
</compile_context>

<pallas_src>
import functools

import jax
import jax.numpy as jnp
from jax.experimental import pallas as pl
from jax.experimental.pallas import tpu as pltpu

SCALE_FACTOR = 1.0
DROPOUT_P = 0.0   # p=0.0 -> F.dropout is the identity; no RNG / masking emitted in-kernel


def _round_up(x: int, m: int) -> int:
    return (x + m - 1) // m * m


def _attn_kernel(q_ref, k_ref, v_ref, o_ref, *, scale: float):
    # Block shapes (unpadded feature dims):
    #   q_ref: (Bb, Tq, D)    k_ref: (Bb, Lk, D)
    #   v_ref: (Bb, Lk, Dv)   o_ref: (Bb, Tq, Dv)
    q = q_ref[...]
    k = k_ref[...]
    v = v_ref[...]

    # scores = q @ k^T (batched), contracting last dims directly — no transposed copy of k.
    s = jax.lax.dot_general(
        q, k,
        dimension_numbers=(((2,), (2,)), ((0,), (0,))),
        preferred_element_type=jnp.float32,
        precision=jax.lax.Precision.HIGHEST,
    )                                                       # (Bb, Tq, Lk) f32

    if scale != 1.0:                                        # static check: skip dead x1.0 multiply
        s = s * jnp.float32(scale)

    # Numerically-stable softmax in f32; normalization deferred past the second matmul
    # (scales Dv output lanes instead of Lk score lanes).
    m = jnp.max(s, axis=-1, keepdims=True)
    e = jnp.exp(s - m)
    denom = jnp.sum(e, axis=-1, keepdims=True)              # (Bb, Tq, 1)

    # dropout(p=0.0) is the identity -> nothing to do.

    ev = jax.lax.dot_general(
        e.astype(v.dtype), v,
        dimension_numbers=(((2,), (1,)), ((0,), (0,))),
        preferred_element_type=jnp.float32,
        precision=jax.lax.Precision.HIGHEST,
    )                                                       # (Bb, Tq, Dv) f32

    o = ev * pl.reciprocal(denom, approx=False)             # exact: (Bb,Tq,1) elems, negligible cost
    o_ref[...] = o.astype(o_ref.dtype)


def attention_pallas(q, k, v, *, scale_factor=SCALE_FACTOR, batch_block=8):
    B, Lq, D = q.shape
    Bk, Lk, Dk = k.shape
    Bv, Lkv, Dv = v.shape
    assert B == Bk == Bv and D == Dk and Lk == Lkv

    # Sublane granularity (bf16 packs 2 rows per sublane).
    sub = 16 if q.dtype == jnp.bfloat16 else 8

    # Query tile: favour MXU row occupancy (Tq up to 128) over batch blocking.
    Tq = min(_round_up(Lq, sub), 128)
    Lqp = _round_up(Lq, Tq)
    n_q_tiles = Lqp // Tq

    Bb = max(1, min(batch_block, B))
    # v7x: ensure >= 2 parallel grid steps when there is only one q tile, so both
    # TensorCores get work for tiny batches (no effect on single-TC v5e/v6e).
    if n_q_tiles == 1 and B > 1:
        Bb = min(Bb, max(1, B // 2))

    # VMEM budget: double-buffered q/k/v/out blocks must fit comfortably (v7x: 64 MiB phys).
    itemsize = q.dtype.itemsize

    def _block_bytes(bb):
        qb = bb * Tq * D * itemsize
        kb = bb * Lk * D * itemsize
        vb = bb * Lk * Dv * itemsize
        ob = bb * Tq * Dv * itemsize
        return 2 * (qb + kb + vb + ob)

    VMEM_BUDGET = 48 * 1024 * 1024
    while Bb > 1 and _block_bytes(Bb) > VMEM_BUDGET:
        Bb = max(1, Bb // 2)
    # TODO(synk): for large Lk, add an "arbitrary" Lk grid axis with online-softmax
    # accumulators (flash style) so VMEM use is bounded independent of Lk.

    Bp = _round_up(B, Bb)

    # Pad only when strictly necessary (single jnp.pad per tensor, zero fill).
    def _maybe_pad(x, b_to, l_to):
        pad_b, pad_l = b_to - x.shape[0], l_to - x.shape[1]
        if pad_b == 0 and pad_l == 0:
            return x
        return jnp.pad(x, ((0, pad_b), (0, pad_l), (0, 0)))

    qp = _maybe_pad(q, Bp, Lqp)
    kp = _maybe_pad(k, Bp, Lk)
    vp = _maybe_pad(v, Bp, Lk)

    kernel = functools.partial(_attn_kernel, scale=float(scale_factor))

    compiler_kwargs = dict(dimension_semantics=("parallel", "parallel"))
    est = _block_bytes(Bb) + (1 << 20)  # headroom for kernel-internal temporaries
    if est > 16 * 1024 * 1024:          # only raise the limit when actually needed
        compiler_kwargs["vmem_limit_bytes"] = min(est, VMEM_BUDGET)

    grid = (Bp // Bb, n_q_tiles)
    out = pl.pallas_call(
        kernel,
        out_shape=jax.ShapeDtypeStruct((Bp, Lqp, Dv), q.dtype),
        grid_spec=pl.GridSpec(
            grid=grid,
            in_specs=[
                pl.BlockSpec((Bb, Tq, D), lambda b, i: (b, i, 0)),
                pl.BlockSpec((Bb, Lk, D), lambda b, i: (b, 0, 0)),
                pl.BlockSpec((Bb, Lk, Dv), lambda b, i: (b, 0, 0)),
            ],
            out_specs=pl.BlockSpec((Bb, Tq, Dv), lambda b, i: (b, i, 0)),
        ),
        compiler_params=pltpu.CompilerParams(**compiler_kwargs),
    )(qp, kp, vp)

    if (Bp, Lqp) != (B, Lq):
        out = out[:B, :Lq, :]
    return out


def attention_ref(q, k, v, scale_factor=SCALE_FACTOR):
    hi = jax.lax.Precision.HIGHEST
    s = jnp.einsum("bqd,bkd->bqk", q.astype(jnp.float32), k.astype(jnp.float32),
                   precision=hi) * scale_factor
    p = jax.nn.softmax(s, axis=-1)
    o = jnp.einsum("bqk,bkd->bqd", p, v.astype(jnp.float32), precision=hi)
    return o.astype(q.dtype)


if __name__ == "__main__":
    key = jax.random.PRNGKey(0)
    kq, kk, kv = jax.random.split(key, 3)

    B, Lq, Lk, D, Dv = 2, 16, 48, 32, 32
    q = jax.random.normal(kq, (B, Lq, D), dtype=jnp.float32)
    k = jax.random.normal(kk, (B, Lk, D), dtype=jnp.float32)
    v = jax.random.normal(kv, (B, Lk, Dv), dtype=jnp.float32)

    out = jax.block_until_ready(attention_pallas(q, k, v))
    ref = attention_ref(q, k, v)

    assert out.shape == (B, Lq, Dv)
    max_err = float(jnp.max(jnp.abs(out - ref)))
    assert jnp.allclose(out, ref, atol=1e-3, rtol=1e-3), f"mismatch vs reference (max abs err {max_err})"

    print("KERNEL_OK")
</pallas_src>

<mosaic_0001>
module attributes {stable_mosaic.version = 11 : i64} {
  func.func @_attn_kernel(%arg0: i32, %arg1: i32, %arg2: memref<1x16x32xf32, #tpu.memory_space<vmem>>, %arg3: memref<1x48x32xf32, #tpu.memory_space<vmem>>, %arg4: memref<1x48x32xf32, #tpu.memory_space<vmem>>, %arg5: memref<1x16x32xf32, #tpu.memory_space<vmem>>) attributes {dimension_semantics = [#tpu.dimension_semantics<parallel>, #tpu.dimension_semantics<parallel>], iteration_bounds = array<i64: 2, 1>, scalar_prefetch = 0 : i64, scratch_operands = 0 : i64, tpu.core_type = #tpu.core_type<tc>, window_params = [{transform_indices = @transform_0, window_bounds = array<i64: 1, 16, 32>}, {transform_indices = @transform_1, window_bounds = array<i64: 1, 48, 32>}, {transform_indices = @transform_2, window_bounds = array<i64: 1, 48, 32>}, {transform_indices = @transform_3, window_bounds = array<i64: 1, 16, 32>}]} {
    %c0 = arith.constant 0 : index
    %c0_0 = arith.constant 0 : index
    %c0_1 = arith.constant 0 : index
    %0 = vector.load %arg2[%c0, %c0_0, %c0_1] : memref<1x16x32xf32, #tpu.memory_space<vmem>>, vector<1x16x32xf32>
    %c0_2 = arith.constant 0 : index
    %c0_3 = arith.constant 0 : index
    %c0_4 = arith.constant 0 : index
    %1 = vector.load %arg3[%c0_2, %c0_3, %c0_4] : memref<1x48x32xf32, #tpu.memory_space<vmem>>, vector<1x48x32xf32>
    %c0_5 = arith.constant 0 : index
    %c0_6 = arith.constant 0 : index
    %c0_7 = arith.constant 0 : index
    %2 = vector.load %arg4[%c0_5, %c0_6, %c0_7] : memref<1x48x32xf32, #tpu.memory_space<vmem>>, vector<1x48x32xf32>
    %cst = arith.constant dense<0.000000e+00> : vector<1x16x48xf32>
    %3 = tpu.matmul %0, %1, %cst {dimension_numbers = #tpu.dot_dimension_numbers<[2], [2], [1], [1], [0, 0, 0, 1, 1, 1], [0], [0]>, precision = #tpu.contract_precision<fp32>} : vector<1x16x32xf32>, vector<1x48x32xf32>, vector<1x16x48xf32> -> vector<1x16x48xf32>
    %cst_8 = arith.constant dense<0xFF800000> : vector<1x16xf32>
    %4 = vector.multi_reduction <maximumf>, %3, %cst_8 [2] : vector<1x16x48xf32> to vector<1x16xf32>
    %5 = vector.shape_cast %4 : vector<1x16xf32> to vector<1x16x1xf32>
    %6 = vector.broadcast %5 : vector<1x16x1xf32> to vector<1x16x48xf32>
    %7 = arith.subf %3, %6 : vector<1x16x48xf32>
    %8 = math.exp %7 : vector<1x16x48xf32>
    %cst_9 = arith.constant dense<0.000000e+00> : vector<1x16xf32>
    %9 = vector.multi_reduction <add>, %8, %cst_9 [2] : vector<1x16x48xf32> to vector<1x16xf32>
    %10 = vector.shape_cast %9 : vector<1x16xf32> to vector<1x16x1xf32>
    %cst_10 = arith.constant dense<0.000000e+00> : vector<1x16x32xf32>
    %11 = tpu.matmul %8, %2, %cst_10 {dimension_numbers = #tpu.dot_dimension_numbers<[2], [1], [1], [2], [0, 0, 0, 1, 1, 2], [0], [0]>, precision = #tpu.contract_precision<fp32>} : vector<1x16x48xf32>, vector<1x48x32xf32>, vector<1x16x32xf32> -> vector<1x16x32xf32>
    %12 = tpu.reciprocal %10 : vector<1x16x1xf32> -> vector<1x16x1xf32>
    %13 = vector.broadcast %12 : vector<1x16x1xf32> to vector<1x16x32xf32>
    %14 = arith.mulf %11, %13 : vector<1x16x32xf32>
    %c0_11 = arith.constant 0 : index
    %c0_12 = arith.constant 0 : index
    %c0_13 = arith.constant 0 : index
    %15 = vector.load %arg5[%c0_11, %c0_12, %c0_13] : memref<1x16x32xf32, #tpu.memory_space<vmem>>, vector<1x16x32xf32>
    tpu.vector_store %arg5[%c0_11, %c0_12, %c0_13], %14 {strides = array<i32>} : memref<1x16x32xf32, #tpu.memory_space<vmem>>, vector<1x16x32xf32>,
    return
  }
  func.func @transform_0(%arg0: i32, %arg1: i32) -> (i32, i32, i32) {
    %c0_i32 = arith.constant 0 : i32
    %c0_i32_0 = arith.constant 0 : i32
    return %arg0, %arg1, %c0_i32 : i32, i32, i32
  }
  func.func @transform_1(%arg0: i32, %arg1: i32) -> (i32, i32, i32) {
    %c0_i32 = arith.constant 0 : i32
    %c0_i32_0 = arith.constant 0 : i32
    %c0_i32_1 = arith.constant 0 : i32
    return %arg0, %c0_i32, %c0_i32_0 : i32, i32, i32
  }
  func.func @transform_2(%arg0: i32, %arg1: i32) -> (i32, i32, i32) {
    %c0_i32 = arith.constant 0 : i32
    %c0_i32_0 = arith.constant 0 : i32
    %c0_i32_1 = arith.constant 0 : i32
    return %arg0, %c0_i32, %c0_i32_0 : i32, i32, i32
  }
  func.func @transform_3(%arg0: i32, %arg1: i32) -> (i32, i32, i32) {
    %c0_i32 = arith.constant 0 : i32
    %c0_i32_0 = arith.constant 0 : i32
    return %arg0, %arg1, %c0_i32 : i32, i32, i32
  }
}

</mosaic_0001>

<llo_original>
// kernel: tpu_custom_call.1
$region0: #{tpu_custom_call.1}
  #allocation0 [shape = 'u32[]', space=smem, size = 0x4, offset = 0x4, fixed_abs, tag = 'smem constant byte address 0x4 - core index']
  #allocation1 [shape = 'u32[72,128]{1,0:T(1,128)}', space=vmem, size = 0x9000, scoped, tag = 'internal scratch']
  %s0 = inlined_call_operand.vmem [shape: f32[2,16,32], index: 0, kind: input, shape index: {}]
  %s1 = inlined_call_operand.vmem [shape: f32[2,48,32], index: 1, kind: input, shape index: {}]
  %s2 = inlined_call_operand.vmem [shape: f32[2,48,32], index: 2, kind: input, shape index: {}]
  %s3 = inlined_call_operand.hbm [shape: f32[2,16,32], index: 3, kind: output, shape index: {}]
  %s4 = sld [smem:[#allocation0]]
  $region45: #{tpu_custom_call.1} parent=0
    _
  %s6 = ssub.s32 1, %s4
  %s7 = scalar_select 0, %s6, %s4
  $region1: #{tpu_custom_call.1} parent=0
    #allocation2 [shape = 'u8[16384]{0}', space=vmem, size = 0x4000, scoped, tag = 'output window, operand 0']
    #allocation3 [shape = 's32[2]{0}', space=sflag, size = 0x8, scoped, tag = 'scoped memory for tpu_custom_call.1']
    %8 = vsyncpa [#allocation3], 0
    %s9 = scalar_lea.sflag [#allocation3], 1
    %10 = vsyncpa %s9, 0
    loop: start=0, step=1, limit=4
    $region2: #{tpu_custom_call.1} parent=1 // loop_pre_header
      _
    $region3: #{tpu_custom_call.1} parent=1 // loop_header
      %s12 = sphi 0, %s16
      %p13 = scmp.ge.s32.totalorder %s12, 4
      %s19 = sphi 0, %s31
      %s20 = sphi 0, %s27
      %s21 = sphi 0, %s19
      %s22 = sphi 0, %s20
      %s23 = sphi 0, %s21
      %s24 = sphi 0, %s22
      %s36 = sphi 0, %s38
      %s39 = sphi 0, %s36
      %s40 = sphi 0, %s39
      %s56 = sphi 0, %s40
      %s62 = sphi 0, %s64
      %s65 = sphi 0, %s62
      %s66 = sphi 0, %s65
      %s82 = sphi 0, %s66
      %s88 = sphi 0, %s90
      %s91 = sphi 0, %s88
      %s92 = sphi 0, %s91
      %s108 = sphi 0, %s92
      %s116 = sphi 0, %s118
      %s119 = sphi 0, %s116
      %s120 = sphi 0, %s119
      %s136 = sphi 0, %s120
    $region4: #{tpu_custom_call.1} parent=1 // loop_header_branch
      %15 = sbr.rel (%p13) target = $region8
    $region5: #{tpu_custom_call.1} parent=1 // loop_body
      %s17 = ssub.s32 %s12, 1
      %s18 = ssub.s32 %s12, 2
      %s25 = sadd.s32 1, %s20
      %p26 = scmp.ge.s32.totalorder %s25, 1
      %s27 = scalar_select %p26, 0, %s25
      %s28 = sadd.s32 1, %s19
      %s29 = scalar_select %p26, %s28, %s19
      %p30 = scmp.ge.s32.totalorder %s29, 2
      %s31 = scalar_select %p30, 0, %s29
      %s32 = ssub.s32 %s19, %s31
      %s33 = ssub.s32 %s20, %s27
      %s34 = sor.u32 %s32, %s33
      %p35 = scmp.eq.s32.totalorder %s34, 0
      %s37 = sadd.s32 %s36, 1
      %s38 = scalar_select %p35, %s36, %s37
      %p41 = pneg %p35
      %p42 = scmp.eq.s32.totalorder %s12, 1
      %p43 = por %p41, %p42
      %p44 = scmp.ne.s32.totalorder %s36, %s39
      %p45 = scmp.eq.s32.totalorder %s12, 0
      %p46 = por %p44, %p45
      %p47 = scmp.ne.s32.totalorder %s36, %s39
      %p48 = scmp.eq.s32.totalorder %s17, 1
      %p49 = por %p47, %p48
      %p50 = scmp.ne.s32.totalorder %s39, %s40
      %p51 = scmp.eq.s32.totalorder %s17, 0
      %p52 = por %p50, %p51
      %p53 = scmp.ne.s32.totalorder %s39, %s40
      %p54 = scmp.eq.s32.totalorder %s18, 1
      %p55 = por %p53, %p54
      %p57 = scmp.ne.s32.totalorder %s40, %s56
      %p58 = scmp.eq.s32.totalorder %s18, 0
      %p59 = por %p57, %p58
      %s60 = ssub.s32 %s19, %s31
      %p61 = scmp.eq.s32.totalorder %s60, 0
      %s63 = sadd.s32 %s62, 1
      %s64 = scalar_select %p61, %s62, %s63
      %p67 = pneg %p61
      %p68 = scmp.eq.s32.totalorder %s12, 1
      %p69 = por %p67, %p68
      %p70 = scmp.ne.s32.totalorder %s62, %s65
      %p71 = scmp.eq.s32.totalorder %s12, 0
      %p72 = por %p70, %p71
      %p73 = scmp.ne.s32.totalorder %s62, %s65
      %p74 = scmp.eq.s32.totalorder %s17, 1
      %p75 = por %p73, %p74
      %p76 = scmp.ne.s32.totalorder %s65, %s66
      %p77 = scmp.eq.s32.totalorder %s17, 0
      %p78 = por %p76, %p77
      %p79 = scmp.ne.s32.totalorder %s65, %s66
      %p80 = scmp.eq.s32.totalorder %s18, 1
      %p81 = por %p79, %p80
      %p83 = scmp.ne.s32.totalorder %s66, %s82
      %p84 = scmp.eq.s32.totalorder %s18, 0
      %p85 = por %p83, %p84
      %s86 = ssub.s32 %s19, %s31
      %p87 = scmp.eq.s32.totalorder %s86, 0
      %s89 = sadd.s32 %s88, 1
      %s90 = scalar_select %p87, %s88, %s89
      %p93 = pneg %p87
      %p94 = scmp.eq.s32.totalorder %s12, 1
      %p95 = por %p93, %p94
      %p96 = scmp.ne.s32.totalorder %s88, %s91
      %p97 = scmp.eq.s32.totalorder %s12, 0
      %p98 = por %p96, %p97
      %p99 = scmp.ne.s32.totalorder %s88, %s91
      %p100 = scmp.eq.s32.totalorder %s17, 1
      %p101 = por %p99, %p100
      %p102 = scmp.ne.s32.totalorder %s91, %s92
      %p103 = scmp.eq.s32.totalorder %s17, 0
      %p104 = por %p102, %p103
      %p105 = scmp.ne.s32.totalorder %s91, %s92
      %p106 = scmp.eq.s32.totalorder %s18, 1
      %p107 = por %p105, %p106
      %p109 = scmp.ne.s32.totalorder %s92, %s108
      %p110 = scmp.eq.s32.totalorder %s18, 0
      %p111 = por %p109, %p110
      %s112 = ssub.s32 %s19, %s31
      %s113 = ssub.s32 %s20, %s27
      %s114 = sor.u32 %s112, %s113
      %p115 = scmp.eq.s32.totalorder %s114, 0
      %s117 = sadd.s32 %s116, 1
      %s118 = scalar_select %p115, %s116, %s117
      %p121 = pneg %p115
      %p122 = scmp.eq.s32.totalorder %s12, 1
      %p123 = por %p121, %p122
      %p124 = scmp.ne.s32.totalorder %s116, %s119
      %p125 = scmp.eq.s32.totalorder %s12, 0
      %p126 = por %p124, %p125
      %p127 = scmp.ne.s32.totalorder %s116, %s119
      %p128 = scmp.eq.s32.totalorder %s17, 1
      %p129 = por %p127, %p128
      %p130 = scmp.ne.s32.totalorder %s119, %s120
      %p131 = scmp.eq.s32.totalorder %s17, 0
      %p132 = por %p130, %p131
      %p133 = scmp.ne.s32.totalorder %s119, %s120
      %p134 = scmp.eq.s32.totalorder %s18, 1
      %p135 = por %p133, %p134
      %p137 = scmp.ne.s32.totalorder %s120, %s136
      %p138 = scmp.eq.s32.totalorder %s18, 0
      %p139 = por %p137, %p138
      %p140 = scmp.le.s32.totalorder 1, %s12
      %p141 = scmp.lt.s32.totalorder %s12, 3
      %p142 = pnand %p140, %p141
      %p143 = pneg %p142
      // Predicated region
      $region9: #{tpu_custom_call.1} parent=5 // pred_check
        _
      $region10: #{tpu_custom_call.1} parent=5 // pred_check_branch
        %145 = sbr.rel (%p142) target = $region12
      $region11: #{tpu_custom_call.1} parent=5 // pred_region
        %s146 = ssub.s32 %s12, 1
      $region12: #{tpu_custom_call.1} parent=5 // pred_fallthru
        _
      %p147 = scmp.lt.s32.totalorder %s12, 2
      // Predicated region
      $region13: #{tpu_custom_call.1} parent=5 // pred_check
        %p148 = pneg %p147
      $region14: #{tpu_custom_call.1} parent=5 // pred_check_branch
        %150 = sbr.rel (%p148) target = $region16
      $region15: #{tpu_custom_call.1} parent=5 // pred_region
        // Predicated region
        $region17: #{tpu_custom_call.1} parent=15 // pred_check
          %p151 = pneg %p46
        $region18: #{tpu_custom_call.1} parent=15 // pred_check_branch
          %153 = sbr.rel (%p151) target = $region20
        $region19: #{tpu_custom_call.1} parent=15 // pred_region
          %s154 = smul.u32 2, %s20
          %p155 = scmp.lt.s32.totalorder %s19, 1
          %s156 = scalar_select %p155, %s19, 1
          %p157 = scmp.lt.s32.totalorder %s154, 1
          %s158 = scalar_select %p157, %s154, 1
          %s159 = smul.addr %s156, 2
          %s160 = sadd.s32 %s158, %s159
          %s161 = smul.addr %s160, 8
          %s162 = scalar_lea.vmem %s0, %s161
          %s163 = smul.u32 2, %s20
        $region20: #{tpu_custom_call.1} parent=15 // pred_fallthru
          _
        // Predicated region
        $region21: #{tpu_custom_call.1} parent=15 // pred_check
          %p164 = pneg %p72
        $region22: #{tpu_custom_call.1} parent=15 // pred_check_branch
          %166 = sbr.rel (%p164) target = $region24
        $region23: #{tpu_custom_call.1} parent=15 // pred_region
          %p167 = scmp.lt.s32.totalorder %s19, 1
          %s168 = scalar_select %p167, %s19, 1
          %s169 = smul.addr %s168, 6
          %s170 = smul.addr %s169, 8
          %s171 = scalar_lea.vmem %s1, %s170
        $region24: #{tpu_custom_call.1} parent=15 // pred_fallthru
          _
        // Predicated region
        $region25: #{tpu_custom_call.1} parent=15 // pred_check
          %p172 = pneg %p98
        $region26: #{tpu_custom_call.1} parent=15 // pred_check_branch
          %174 = sbr.rel (%p172) target = $region28
        $region27: #{tpu_custom_call.1} parent=15 // pred_region
          %p175 = scmp.lt.s32.totalorder %s19, 1
          %s176 = scalar_select %p175, %s19, 1
          %s177 = smul.addr %s176, 6
          %s178 = smul.addr %s177, 8
          %s179 = scalar_lea.vmem %s2, %s178
        $region28: #{tpu_custom_call.1} parent=15 // pred_fallthru
          _
      $region16: #{tpu_custom_call.1} parent=5 // pred_fallthru
        _
      %p180 = scmp.le.s32.totalorder 1, %s12
      %p181 = scmp.lt.s32.totalorder %s12, 3
      %p182 = pnand %p180, %p181
      %p183 = pneg %p182
      // Predicated region
      $region29: #{tpu_custom_call.1} parent=5 // pred_check
        _
      $region30: #{tpu_custom_call.1} parent=5 // pred_check_branch
        %185 = sbr.rel (%p182) target = $region32
      $region31: #{tpu_custom_call.1} parent=5 // pred_region
        %s186 = ssub.s32 %s12, 1
        %s187 = smul.u32 2, %s22
        %p188 = scmp.lt.s32.totalorder %s21, 1
        %s189 = scalar_select %p188, %s21, 1
        %p190 = scmp.lt.s32.totalorder %s187, 1
        %s191 = scalar_select %p190, %s187, 1
        %s192 = smul.addr %s189, 2
        %s193 = sadd.s32 %s191, %s192
        %s194 = smul.addr %s193, 8
        %s195 = scalar_lea.vmem %s0, %s194
        %p196 = pneg %p52
        %p197 = pneg %p49
        %p198 = scmp.lt.s32.totalorder %s21, 1
        %s199 = scalar_select %p198, %s21, 1
        %s200 = smul.addr %s199, 6
        %s201 = smul.addr %s200, 8
        %s202 = scalar_lea.vmem %s1, %s201
        %p203 = pneg %p78
        %p204 = pneg %p75
        %p205 = scmp.lt.s32.totalorder %s21, 1
        %s206 = scalar_select %p205, %s21, 1
        %s207 = smul.addr %s206, 6
        %s208 = smul.addr %s207, 8
        %s209 = scalar_lea.vmem %s2, %s208
        %p210 = pneg %p104
        %p211 = pneg %p101
        %p212 = pneg %p132
        %p213 = pneg %p129
        %s214 = sand.u32 %s119, 1
        %s215 = scalar_lea.sflag [#allocation3], %s214
        %s216 = sand.u32 %s119, 1
        %s217 = smul.addr %s216, 16
        %s218 = scalar_lea.vmem [#allocation2], %s217
        %s219 = smul.u32 2, %s22
        %p220 = scmp.lt.s32.totalorder %s21, 1
        %s221 = scalar_select %p220, %s21, 1
        %p222 = scmp.lt.s32.totalorder %s219, 1
        %s223 = scalar_select %p222, %s219, 1
        %s224 = smul.addr %s221, 2
        %s225 = sadd.s32 %s223, %s224
        %s226 = smul.addr %s225, 8
        %s227 = scalar_lea.vmem %s0, %s226
        %s228 = smul.u32 2, %s22
        %p229 = scmp.lt.s32.totalorder %s21, 1
        %s230 = scalar_select %p229, %s21, 1
        %s231 = smul.addr %s230, 6
        %s232 = smul.addr %s231, 8
        %s233 = scalar_lea.vmem %s1, %s232
        %p234 = scmp.lt.s32.totalorder %s21, 1
        %s235 = scalar_select %p234, %s21, 1
        %s236 = smul.addr %s235, 6
        %s237 = smul.addr %s236, 8
        %s238 = scalar_lea.vmem %s2, %s237
        %s239 = smul.u32 2, %s22
        %v240 = vld [vmem:[%s227] sm:$0xff]
        %v241 = vld [vmem:[%s227 + $0x8] sm:$0xff]
        %v242 = vld [vmem:[%s233] sm:$0xff]
        %v243 = vld [vmem:[%s233 + $0x8] sm:$0xff]
        %v244 = vld [vmem:[%s233 + $0x10] sm:$0xff]
        %v245 = vld [vmem:[%s233 + $0x18] sm:$0xff]
        %v246 = vld [vmem:[%s233 + $0x20] sm:$0xff]
        %v247 = vld [vmem:[%s233 + $0x28] sm:$0xff]
        %v248 = vld [vmem:[%s238] sm:$0xff]
        %v249 = vld [vmem:[%s238 + $0x8] sm:$0xff]
        %v250 = vld [vmem:[%s238 + $0x10] sm:$0xff]
        %v251 = vld [vmem:[%s238 + $0x18] sm:$0xff]
        %v252 = vld [vmem:[%s238 + $0x20] sm:$0xff]
        %v253 = vld [vmem:[%s238 + $0x28] sm:$0xff]
        %vm254 = vcmask 261120
        %v256 = vsel %vm254, %v240, 0
        %v259 = vsel %vm254, %v241, 0
        %v262 = vsel %vm254, %v242, 0
        %v265 = vsel %vm254, %v243, 0
        %v268 = vsel %vm254, %v244, 0
        %v271 = vsel %vm254, %v245, 0
        %v274 = vsel %vm254, %v246, 0
        %v277 = vsel %vm254, %v247, 0
        %279 = vmatpush.xpose.msra.mxu0 0.0
        %280 = vmatpush.xpose.msra.mxu0 0.0
        %281 = vmatpush.xpose.msra.mxu0 0.0
        %282 = vmatpush.xpose.msra.mxu0 0.0
        %283 = vmatpush.xpose.msra.mxu0 0.0
        %284 = vmatpush.xpose.msra.mxu0 0.0
        %285 = vmatpush.xpose.msra.mxu0 0.0
        %286 = vmatpush.xpose.msra.mxu0 0.0
        %287 = vmatpush.xpose.msra.mxu0 0.0
        %288 = vmatpush.xpose.msra.mxu0 0.0
        %v289 = vand.u32 %v277, 4294901760
        %290 = vmatpush.xpose.msra.mxu0 %v289
        %v291 = vand.u32 %v274, 4294901760
        %292 = vmatpush.xpose.msra.mxu0 %v291
        %v293 = vand.u32 %v271, 4294901760
        %294 = vmatpush.xpose.msra.mxu0 %v293
        %v295 = vand.u32 %v268, 4294901760
        %296 = vmatpush.xpose.msra.mxu0 %v295
        %v297 = vand.u32 %v265, 4294901760
        %298 = vmatpush.xpose.msra.mxu0 %v297
        %v299 = vand.u32 %v262, 4294901760
        %300 = vmatpush.xpose.msra.mxu0 %v299
        %v301 = vand.u32 %v256, 4294901760
        %v302 = vsub.f32 %v256, %v301
        %v303 = vand.u32 %v302, 4294901760
        %v304 = vsub.f32 %v302, %v303
        %v305 = vand.u32 %v304, 4294901760
        %306 = vmatmul.f32.gmra.mxu0 %v305
        %v307 = vpop.f32.mrf.mxu0
        %v308 = vadd.f32 0.0, %v307
        %v309 = vand.u32 %v259, 4294901760
        %v310 = vsub.f32 %v259, %v309
        %v311 = vand.u32 %v310, 4294901760
        %v312 = vsub.f32 %v310, %v311
        %v313 = vand.u32 %v312, 4294901760
        %314 = vmatmul.f32.gmra.mxu0 %v313
        %v315 = vpop.f32.mrf.mxu0
        %v316 = vadd.f32 0.0, %v315
        %317 = vdwg.mxu0
        %318 = vmatpush.xpose.msra.mxu0 0.0
        %319 = vmatpush.xpose.msra.mxu0 0.0
        %320 = vmatpush.xpose.msra.mxu0 0.0
        %321 = vmatpush.xpose.msra.mxu0 0.0
        %322 = vmatpush.xpose.msra.mxu0 0.0
        %323 = vmatpush.xpose.msra.mxu0 0.0
        %324 = vmatpush.xpose.msra.mxu0 0.0
        %325 = vmatpush.xpose.msra.mxu0 0.0
        %326 = vmatpush.xpose.msra.mxu0 0.0
        %327 = vmatpush.xpose.msra.mxu0 0.0
        %v328 = vand.u32 %v277, 4294901760
        %v329 = vsub.f32 %v277, %v328
        %v330 = vand.u32 %v329, 4294901760
        %v331 = vsub.f32 %v329, %v330
        %v332 = vand.u32 %v331, 4294901760
        %333 = vmatpush.xpose.msra.mxu0 %v332
        %v334 = vand.u32 %v274, 4294901760
        %v335 = vsub.f32 %v274, %v334
        %v336 = vand.u32 %v335, 4294901760
        %v337 = vsub.f32 %v335, %v336
        %v338 = vand.u32 %v337, 4294901760
        %339 = vmatpush.xpose.msra.mxu0 %v338
        %v340 = vand.u32 %v271, 4294901760
        %v341 = vsub.f32 %v271, %v340
        %v342 = vand.u32 %v341, 4294901760
        %v343 = vsub.f32 %v341, %v342
        %v344 = vand.u32 %v343, 4294901760
        %345 = vmatpush.xpose.msra.mxu0 %v344
        %v346 = vand.u32 %v268, 4294901760
        %v347 = vsub.f32 %v268, %v346
        %v348 = vand.u32 %v347, 4294901760
        %v349 = vsub.f32 %v347, %v348
        %v350 = vand.u32 %v349, 4294901760
        %351 = vmatpush.xpose.msra.mxu0 %v350
        %v352 = vand.u32 %v265, 4294901760
        %v353 = vsub.f32 %v265, %v352
        %v354 = vand.u32 %v353, 4294901760
        %v355 = vsub.f32 %v353, %v354
        %v356 = vand.u32 %v355, 4294901760
        %357 = vmatpush.xpose.msra.mxu0 %v356
        %v358 = vand.u32 %v262, 4294901760
        %v359 = vsub.f32 %v262, %v358
        %v360 = vand.u32 %v359, 4294901760
        %v361 = vsub.f32 %v359, %v360
        %v362 = vand.u32 %v361, 4294901760
        %363 = vmatpush.xpose.msra.mxu0 %v362
        %v364 = vand.u32 %v256, 4294901760
        %365 = vmatmul.f32.gmra.mxu0 %v364
        %v366 = vpop.f32.mrf.mxu0
        %v367 = vadd.f32 %v308, %v366
        %v368 = vand.u32 %v259, 4294901760
        %369 = vmatmul.f32.gmra.mxu0 %v368
        %v370 = vpop.f32.mrf.mxu0
        %v371 = vadd.f32 %v316, %v370
        %372 = vdwg.mxu0
        %373 = vmatpush.xpose.msra.mxu0 0.0
        %374 = vmatpush.xpose.msra.mxu0 0.0
        %375 = vmatpush.xpose.msra.mxu0 0.0
        %376 = vmatpush.xpose.msra.mxu0 0.0
        %377 = vmatpush.xpose.msra.mxu0 0.0
        %378 = vmatpush.xpose.msra.mxu0 0.0
        %379 = vmatpush.xpose.msra.mxu0 0.0
        %380 = vmatpush.xpose.msra.mxu0 0.0
        %381 = vmatpush.xpose.msra.mxu0 0.0
        %382 = vmatpush.xpose.msra.mxu0 0.0
        %v383 = vand.u32 %v277, 4294901760
        %v384 = vsub.f32 %v277, %v383
        %385 = vmatpush.xpose.msra.mxu0 %v384
        %v386 = vand.u32 %v274, 4294901760
        %v387 = vsub.f32 %v274, %v386
        %388 = vmatpush.xpose.msra.mxu0 %v387
        %v389 = vand.u32 %v271, 4294901760
        %v390 = vsub.f32 %v271, %v389
        %391 = vmatpush.xpose.msra.mxu0 %v390
        %v392 = vand.u32 %v268, 4294901760
        %v393 = vsub.f32 %v268, %v392
        %394 = vmatpush.xpose.msra.mxu0 %v393
        %v395 = vand.u32 %v265, 4294901760
        %v396 = vsub.f32 %v265, %v395
        %397 = vmatpush.xpose.msra.mxu0 %v396
        %v398 = vand.u32 %v262, 4294901760
        %v399 = vsub.f32 %v262, %v398
        %400 = vmatpush.xpose.msra.mxu0 %v399
        %v401 = vand.u32 %v256, 4294901760
        %v402 = vsub.f32 %v256, %v401
        %403 = vmatmul.f32.gmra.mxu0 %v402
        %v404 = vpop.f32.mrf.mxu0
        %v405 = vadd.f32 %v367, %v404
        %v406 = vand.u32 %v259, 4294901760
        %v407 = vsub.f32 %v259, %v406
        %408 = vmatmul.f32.gmra.mxu0 %v407
        %v409 = vpop.f32.mrf.mxu0
        %v410 = vadd.f32 %v371, %v409
        %411 = vdwg.mxu0
        %412 = vmatpush.xpose.msra.mxu0 0.0
        %413 = vmatpush.xpose.msra.mxu0 0.0
        %414 = vmatpush.xpose.msra.mxu0 0.0
        %415 = vmatpush.xpose.msra.mxu0 0.0
        %416 = vmatpush.xpose.msra.mxu0 0.0
        %417 = vmatpush.xpose.msra.mxu0 0.0
        %418 = vmatpush.xpose.msra.mxu0 0.0
        %419 = vmatpush.xpose.msra.mxu0 0.0
        %420 = vmatpush.xpose.msra.mxu0 0.0
        %421 = vmatpush.xpose.msra.mxu0 0.0
        %v422 = vand.u32 %v277, 4294901760
        %423 = vmatpush.xpose.msra.mxu0 %v422
        %v424 = vand.u32 %v274, 4294901760
        %425 = vmatpush.xpose.msra.mxu0 %v424
        %v426 = vand.u32 %v271, 4294901760
        %427 = vmatpush.xpose.msra.mxu0 %v426
        %v428 = vand.u32 %v268, 4294901760
        %429 = vmatpush.xpose.msra.mxu0 %v428
        %v430 = vand.u32 %v265, 4294901760
        %431 = vmatpush.xpose.msra.mxu0 %v430
        %v432 = vand.u32 %v262, 4294901760
        %433 = vmatpush.xpose.msra.mxu0 %v432
        %v434 = vand.u32 %v256, 4294901760
        %v435 = vsub.f32 %v256, %v434
        %v436 = vand.u32 %v435, 4294901760
        %437 = vmatmul.f32.gmra.mxu0 %v436
        %v438 = vpop.f32.mrf.mxu0
        %v439 = vadd.f32 %v405, %v438
        %v440 = vand.u32 %v259, 4294901760
        %v441 = vsub.f32 %v259, %v440
        %v442 = vand.u32 %v441, 4294901760
        %443 = vmatmul.f32.gmra.mxu0 %v442
        %v444 = vpop.f32.mrf.mxu0
        %v445 = vadd.f32 %v410, %v444
        %446 = vdwg.mxu0
        %447 = vmatpush.xpose.msra.mxu0 0.0
        %448 = vmatpush.xpose.msra.mxu0 0.0
        %449 = vmatpush.xpose.msra.mxu0 0.0
        %450 = vmatpush.xpose.msra.mxu0 0.0
        %451 = vmatpush.xpose.msra.mxu0 0.0
        %452 = vmatpush.xpose.msra.mxu0 0.0
        %453 = vmatpush.xpose.msra.mxu0 0.0
        %454 = vmatpush.xpose.msra.mxu0 0.0
        %455 = vmatpush.xpose.msra.mxu0 0.0
        %456 = vmatpush.xpose.msra.mxu0 0.0
        %v457 = vand.u32 %v277, 4294901760
        %v458 = vsub.f32 %v277, %v457
        %v459 = vand.u32 %v458, 4294901760
        %460 = vmatpush.xpose.msra.mxu0 %v459
        %v461 = vand.u32 %v274, 4294901760
        %v462 = vsub.f32 %v274, %v461
        %v463 = vand.u32 %v462, 4294901760
        %464 = vmatpush.xpose.msra.mxu0 %v463
        %v465 = vand.u32 %v271, 4294901760
        %v466 = vsub.f32 %v271, %v465
        %v467 = vand.u32 %v466, 4294901760
        %468 = vmatpush.xpose.msra.mxu0 %v467
        %v469 = vand.u32 %v268, 4294901760
        %v470 = vsub.f32 %v268, %v469
        %v471 = vand.u32 %v470, 4294901760
        %472 = vmatpush.xpose.msra.mxu0 %v471
        %v473 = vand.u32 %v265, 4294901760
        %v474 = vsub.f32 %v265, %v473
        %v475 = vand.u32 %v474, 4294901760
        %476 = vmatpush.xpose.msra.mxu0 %v475
        %v477 = vand.u32 %v262, 4294901760
        %v478 = vsub.f32 %v262, %v477
        %v479 = vand.u32 %v478, 4294901760
        %480 = vmatpush.xpose.msra.mxu0 %v479
        %v481 = vand.u32 %v256, 4294901760
        %482 = vmatmul.f32.gmra.mxu0 %v481
        %v483 = vpop.f32.mrf.mxu0
        %v484 = vadd.f32 %v439, %v483
        %v485 = vand.u32 %v259, 4294901760
        %486 = vmatmul.f32.gmra.mxu0 %v485
        %v487 = vpop.f32.mrf.mxu0
        %v488 = vadd.f32 %v445, %v487
        %489 = vdwg.mxu0
        %490 = vmatpush.xpose.msra.mxu0 0.0
        %491 = vmatpush.xpose.msra.mxu0 0.0
        %492 = vmatpush.xpose.msra.mxu0 0.0
        %493 = vmatpush.xpose.msra.mxu0 0.0
        %494 = vmatpush.xpose.msra.mxu0 0.0
        %495 = vmatpush.xpose.msra.mxu0 0.0
        %496 = vmatpush.xpose.msra.mxu0 0.0
        %497 = vmatpush.xpose.msra.mxu0 0.0
        %498 = vmatpush.xpose.msra.mxu0 0.0
        %499 = vmatpush.xpose.msra.mxu0 0.0
        %v500 = vand.u32 %v277, 4294901760
        %501 = vmatpush.xpose.msra.mxu0 %v500
        %v502 = vand.u32 %v274, 4294901760
        %503 = vmatpush.xpose.msra.mxu0 %v502
        %v504 = vand.u32 %v271, 4294901760
        %505 = vmatpush.xpose.msra.mxu0 %v504
        %v506 = vand.u32 %v268, 4294901760
        %507 = vmatpush.xpose.msra.mxu0 %v506
        %v508 = vand.u32 %v265, 4294901760
        %509 = vmatpush.xpose.msra.mxu0 %v508
        %v510 = vand.u32 %v262, 4294901760
        %511 = vmatpush.xpose.msra.mxu0 %v510
        %v512 = vand.u32 %v256, 4294901760
        %513 = vmatmul.f32.gmra.mxu0 %v512
        %v514 = vpop.f32.mrf.mxu0
        %v515 = vadd.f32 %v484, %v514
        %v516 = vand.u32 %v259, 4294901760
        %517 = vmatmul.f32.gmra.mxu0 %v516
        %v518 = vpop.f32.mrf.mxu0
        %v519 = vadd.f32 %v488, %v518
        %520 = vdwg.mxu0
        %vm521 = vcmask 392192
        %v522 = vsel %vm521, %v515, -inf
        %523 = vmax.xlane.f32.xlu0 %v522
        %v524 = vpop.xlane.xlu0 %523
        %v525 = vsel %vm521, %v519, -inf
        %526 = vmax.xlane.f32.xlu0 %v525
        %v527 = vpop.xlane.xlu0 %526
        %v528 = vsub.f32 %v515, %v524
        %v529 = vsub.f32 %v519, %v527
        %v530 = vmul.f32 %v528, 1.442695
        %v531 = vpow.pop %v530
        %v532 = vmul.f32 %v529, 1.442695
        %v533 = vpow.pop %v532
        %v534 = vsel %vm521, %v531, 0.0
        %535 = vadd.xlane.f32.xlu0 %v534
        %v536 = vpop.xlane.xlu0 %535
        %v537 = vsel %vm521, %v533, 0.0
        %538 = vadd.xlane.f32.xlu0 %v537
        %v539 = vpop.xlane.xlu0 %538
        %v541 = vsel %vm521, %v531, 0
        %v544 = vsel %vm521, %v533, 0
        %546 = vmatpush.msra.mxu0 0.0
        %547 = vmatpush.msra.mxu0 0.0
        %548 = vmatpush.msra.mxu0 0.0
        %549 = vmatpush.msra.mxu0 0.0
        %550 = vmatpush.msra.mxu0 0.0
        %551 = vmatpush.msra.mxu0 0.0
        %552 = vmatpush.msra.mxu0 0.0
        %553 = vmatpush.msra.mxu0 0.0
        %554 = vmatpush.msra.mxu0 0.0
        %555 = vmatpush.msra.mxu0 0.0
        %v556 = vand.u32 %v253, 4294901760
        %557 = vmatpush.msra.mxu0 %v556
        %v558 = vand.u32 %v252, 4294901760
        %559 = vmatpush.msra.mxu0 %v558
        %v560 = vand.u32 %v251, 4294901760
        %561 = vmatpush.msra.mxu0 %v560
        %v562 = vand.u32 %v250, 4294901760
        %563 = vmatpush.msra.mxu0 %v562
        %v564 = vand.u32 %v249, 4294901760
        %565 = vmatpush.msra.mxu0 %v564
        %v566 = vand.u32 %v248, 4294901760
        %567 = vmatpush.msra.mxu0 %v566
        %v568 = vand.u32 %v541, 4294901760
        %v569 = vsub.f32 %v541, %v568
        %v570 = vand.u32 %v569, 4294901760
        %v571 = vsub.f32 %v569, %v570
        %v572 = vand.u32 %v571, 4294901760
        %573 = vmatmul.f32.gmra.mxu0 %v572
        %v574 = vpop.f32.mrf.mxu0
        %v575 = vadd.f32 0.0, %v574
        %v576 = vand.u32 %v544, 4294901760
        %v577 = vsub.f32 %v544, %v576
        %v578 = vand.u32 %v577, 4294901760
        %v579 = vsub.f32 %v577, %v578
        %v580 = vand.u32 %v579, 4294901760
        %581 = vmatmul.f32.gmra.mxu0 %v580
        %v582 = vpop.f32.mrf.mxu0
        %v583 = vadd.f32 0.0, %v582
        %584 = vdwg.mxu0
        %585 = vmatpush.msra.mxu0 0.0
        %586 = vmatpush.msra.mxu0 0.0
        %587 = vmatpush.msra.mxu0 0.0
        %588 = vmatpush.msra.mxu0 0.0
        %589 = vmatpush.msra.mxu0 0.0
        %590 = vmatpush.msra.mxu0 0.0
        %591 = vmatpush.msra.mxu0 0.0
        %592 = vmatpush.msra.mxu0 0.0
        %593 = vmatpush.msra.mxu0 0.0
        %594 = vmatpush.msra.mxu0 0.0
        %v595 = vand.u32 %v253, 4294901760
        %v596 = vsub.f32 %v253, %v595
        %v597 = vand.u32 %v596, 4294901760
        %v598 = vsub.f32 %v596, %v597
        %v599 = vand.u32 %v598, 4294901760
        %600 = vmatpush.msra.mxu0 %v599
        %v601 = vand.u32 %v252, 4294901760
        %v602 = vsub.f32 %v252, %v601
        %v603 = vand.u32 %v602, 4294901760
        %v604 = vsub.f32 %v602, %v603
        %v605 = vand.u32 %v604, 4294901760
        %606 = vmatpush.msra.mxu0 %v605
        %v607 = vand.u32 %v251, 4294901760
        %v608 = vsub.f32 %v251, %v607
        %v609 = vand.u32 %v608, 4294901760
        %v610 = vsub.f32 %v608, %v609
        %v611 = vand.u32 %v610, 4294901760
        %612 = vmatpush.msra.mxu0 %v611
        %v613 = vand.u32 %v250, 4294901760
        %v614 = vsub.f32 %v250, %v613
        %v615 = vand.u32 %v614, 4294901760
        %v616 = vsub.f32 %v614, %v615
        %v617 = vand.u32 %v616, 4294901760
        %618 = vmatpush.msra.mxu0 %v617
        %v619 = vand.u32 %v249, 4294901760
        %v620 = vsub.f32 %v249, %v619
        %v621 = vand.u32 %v620, 4294901760
        %v622 = vsub.f32 %v620, %v621
        %v623 = vand.u32 %v622, 4294901760
        %624 = vmatpush.msra.mxu0 %v623
        %v625 = vand.u32 %v248, 4294901760
        %v626 = vsub.f32 %v248, %v625
        %v627 = vand.u32 %v626, 4294901760
        %v628 = vsub.f32 %v626, %v627
        %v629 = vand.u32 %v628, 4294901760
        %630 = vmatpush.msra.mxu0 %v629
        %v631 = vand.u32 %v541, 4294901760
        %632 = vmatmul.f32.gmra.mxu0 %v631
        %v633 = vpop.f32.mrf.mxu0
        %v634 = vadd.f32 %v575, %v633
        %v635 = vand.u32 %v544, 4294901760
        %636 = vmatmul.f32.gmra.mxu0 %v635
        %v637 = vpop.f32.mrf.mxu0
        %v638 = vadd.f32 %v583, %v637
        %639 = vdwg.mxu0
        %640 = vmatpush.msra.mxu0 0.0
        %641 = vmatpush.msra.mxu0 0.0
        %642 = vmatpush.msra.mxu0 0.0
        %643 = vmatpush.msra.mxu0 0.0
        %644 = vmatpush.msra.mxu0 0.0
        %645 = vmatpush.msra.mxu0 0.0
        %646 = vmatpush.msra.mxu0 0.0
        %647 = vmatpush.msra.mxu0 0.0
        %648 = vmatpush.msra.mxu0 0.0
        %649 = vmatpush.msra.mxu0 0.0
        %v650 = vand.u32 %v253, 4294901760
        %v651 = vsub.f32 %v253, %v650
        %652 = vmatpush.msra.mxu0 %v651
        %v653 = vand.u32 %v252, 4294901760
        %v654 = vsub.f32 %v252, %v653
        %655 = vmatpush.msra.mxu0 %v654
        %v656 = vand.u32 %v251, 4294901760
        %v657 = vsub.f32 %v251, %v656
        %658 = vmatpush.msra.mxu0 %v657
        %v659 = vand.u32 %v250, 4294901760
        %v660 = vsub.f32 %v250, %v659
        %661 = vmatpush.msra.mxu0 %v660
        %v662 = vand.u32 %v249, 4294901760
        %v663 = vsub.f32 %v249, %v662
        %664 = vmatpush.msra.mxu0 %v663
        %v665 = vand.u32 %v248, 4294901760
        %v666 = vsub.f32 %v248, %v665
        %667 = vmatpush.msra.mxu0 %v666
        %v668 = vand.u32 %v541, 4294901760
        %v669 = vsub.f32 %v541, %v668
        %670 = vmatmul.f32.gmra.mxu0 %v669
        %v671 = vpop.f32.mrf.mxu0
        %v672 = vadd.f32 %v634, %v671
        %v673 = vand.u32 %v544, 4294901760
        %v674 = vsub.f32 %v544, %v673
        %675 = vmatmul.f32.gmra.mxu0 %v674
        %v676 = vpop.f32.mrf.mxu0
        %v677 = vadd.f32 %v638, %v676
        %678 = vdwg.mxu0
        %679 = vmatpush.msra.mxu0 0.0
        %680 = vmatpush.msra.mxu0 0.0
        %681 = vmatpush.msra.mxu0 0.0
        %682 = vmatpush.msra.mxu0 0.0
        %683 = vmatpush.msra.mxu0 0.0
        %684 = vmatpush.msra.mxu0 0.0
        %685 = vmatpush.msra.mxu0 0.0
        %686 = vmatpush.msra.mxu0 0.0
        %687 = vmatpush.msra.mxu0 0.0
        %688 = vmatpush.msra.mxu0 0.0
        %v689 = vand.u32 %v253, 4294901760
        %690 = vmatpush.msra.mxu0 %v689
        %v691 = vand.u32 %v252, 4294901760
        %692 = vmatpush.msra.mxu0 %v691
        %v693 = vand.u32 %v251, 4294901760
        %694 = vmatpush.msra.mxu0 %v693
        %v695 = vand.u32 %v250, 4294901760
        %696 = vmatpush.msra.mxu0 %v695
        %v697 = vand.u32 %v249, 4294901760
        %698 = vmatpush.msra.mxu0 %v697
        %v699 = vand.u32 %v248, 4294901760
        %700 = vmatpush.msra.mxu0 %v699
        %v701 = vand.u32 %v541, 4294901760
        %v702 = vsub.f32 %v541, %v701
        %v703 = vand.u32 %v702, 4294901760
        %704 = vmatmul.f32.gmra.mxu0 %v703
        %v705 = vpop.f32.mrf.mxu0
        %v706 = vadd.f32 %v672, %v705
        %v707 = vand.u32 %v544, 4294901760
        %v708 = vsub.f32 %v544, %v707
        %v709 = vand.u32 %v708, 4294901760
        %710 = vmatmul.f32.gmra.mxu0 %v709
        %v711 = vpop.f32.mrf.mxu0
        %v712 = vadd.f32 %v677, %v711
        %713 = vdwg.mxu0
        %714 = vmatpush.msra.mxu0 0.0
        %715 = vmatpush.msra.mxu0 0.0
        %716 = vmatpush.msra.mxu0 0.0
        %717 = vmatpush.msra.mxu0 0.0
        %718 = vmatpush.msra.mxu0 0.0
        %719 = vmatpush.msra.mxu0 0.0
        %720 = vmatpush.msra.mxu0 0.0
        %721 = vmatpush.msra.mxu0 0.0
        %722 = vmatpush.msra.mxu0 0.0
        %723 = vmatpush.msra.mxu0 0.0
        %v724 = vand.u32 %v253, 4294901760
        %v725 = vsub.f32 %v253, %v724
        %v726 = vand.u32 %v725, 4294901760
        %727 = vmatpush.msra.mxu0 %v726
        %v728 = vand.u32 %v252, 4294901760
        %v729 = vsub.f32 %v252, %v728
        %v730 = vand.u32 %v729, 4294901760
        %731 = vmatpush.msra.mxu0 %v730
        %v732 = vand.u32 %v251, 4294901760
        %v733 = vsub.f32 %v251, %v732
        %v734 = vand.u32 %v733, 4294901760
        %735 = vmatpush.msra.mxu0 %v734
        %v736 = vand.u32 %v250, 4294901760
        %v737 = vsub.f32 %v250, %v736
        %v738 = vand.u32 %v737, 4294901760
        %739 = vmatpush.msra.mxu0 %v738
        %v740 = vand.u32 %v249, 4294901760
        %v741 = vsub.f32 %v249, %v740
        %v742 = vand.u32 %v741, 4294901760
        %743 = vmatpush.msra.mxu0 %v742
        %v744 = vand.u32 %v248, 4294901760
        %v745 = vsub.f32 %v248, %v744
        %v746 = vand.u32 %v745, 4294901760
        %747 = vmatpush.msra.mxu0 %v746
        %v748 = vand.u32 %v541, 4294901760
        %749 = vmatmul.f32.gmra.mxu0 %v748
        %v750 = vpop.f32.mrf.mxu0
        %v751 = vadd.f32 %v706, %v750
        %v752 = vand.u32 %v544, 4294901760
        %753 = vmatmul.f32.gmra.mxu0 %v752
        %v754 = vpop.f32.mrf.mxu0
        %v755 = vadd.f32 %v712, %v754
        %756 = vdwg.mxu0
        %757 = vmatpush.msra.mxu0 0.0
        %758 = vmatpush.msra.mxu0 0.0
        %759 = vmatpush.msra.mxu0 0.0
        %760 = vmatpush.msra.mxu0 0.0
        %761 = vmatpush.msra.mxu0 0.0
        %762 = vmatpush.msra.mxu0 0.0
        %763 = vmatpush.msra.mxu0 0.0
        %764 = vmatpush.msra.mxu0 0.0
        %765 = vmatpush.msra.mxu0 0.0
        %766 = vmatpush.msra.mxu0 0.0
        %v767 = vand.u32 %v253, 4294901760
        %768 = vmatpush.msra.mxu0 %v767
        %v769 = vand.u32 %v252, 4294901760
        %770 = vmatpush.msra.mxu0 %v769
        %v771 = vand.u32 %v251, 4294901760
        %772 = vmatpush.msra.mxu0 %v771
        %v773 = vand.u32 %v250, 4294901760
        %774 = vmatpush.msra.mxu0 %v773
        %v775 = vand.u32 %v249, 4294901760
        %776 = vmatpush.msra.mxu0 %v775
        %v777 = vand.u32 %v248, 4294901760
        %778 = vmatpush.msra.mxu0 %v777
        %v779 = vand.u32 %v541, 4294901760
        %780 = vmatmul.f32.gmra.mxu0 %v779
        %v781 = vpop.f32.mrf.mxu0
        %v782 = vadd.f32 %v751, %v781
        %v783 = vand.u32 %v544, 4294901760
        %784 = vmatmul.f32.gmra.mxu0 %v783
        %v785 = vpop.f32.mrf.mxu0
        %v786 = vadd.f32 %v755, %v785
        %787 = vdwg.mxu0
        %v788 = vrcp.pop %v536
        %v789 = vmul.f32 %v536, %v788
        %v790 = vsub.f32 1.0, %v789
        %v791 = vmul.f32 %v788, %v790
        %v792 = vadd.f32 %v788, %v791
        %vm793 = vweird.f32 %v536
        %vm794 = vweird.f32 %v788
        %vm795 = vmor %vm793, %vm794
        %v796 = vsel %vm795, %v788, %v792
        %v797 = vand.u32 2147483647, %v536
        %vm798 = vcmp.eq.f32.partialorder %v797, 8.507059e+37
        %v799 = vand.u32 %v536, 2147483648
        %v800 = vor.u32 1.1754944e-38, %v799
        %v801 = vsel %vm798, %v800, %v796
        %v802 = vrcp.pop %v539
        %v803 = vmul.f32 %v539, %v802
        %v804 = vsub.f32 1.0, %v803
        %v805 = vmul.f32 %v802, %v804
        %v806 = vadd.f32 %v802, %v805
        %vm807 = vweird.f32 %v539
        %vm808 = vweird.f32 %v802
        %vm809 = vmor %vm807, %vm808
        %v810 = vsel %vm809, %v802, %v806
        %v811 = vand.u32 2147483647, %v539
        %vm812 = vcmp.eq.f32.partialorder %v811, 8.507059e+37
        %v813 = vand.u32 %v539, 2147483648
        %v814 = vor.u32 1.1754944e-38, %v813
        %v815 = vsel %vm812, %v814, %v810
        %v816 = vmul.f32 %v782, %v801
        %v817 = vmul.f32 %v786, %v815
        %818 = vst.msk [vmem:[%s218] sm:$0xff] %vm254, %v816
        %819 = vst.msk [vmem:[%s218 + $0x8] sm:$0xff] %vm254, %v817
        %s820 = sand.u32 %s119, 1
        %s821 = scalar_lea.sflag [#allocation3], %s820
        %s822 = sand.u32 %s119, 1
        %s823 = smul.addr %s822, 16
        %s824 = scalar_lea.vmem [#allocation2], %s823
        // Predicated region
        $region33: #{tpu_custom_call.1} parent=31 // pred_check
          %p825 = pneg %p129
        $region34: #{tpu_custom_call.1} parent=31 // pred_check_branch
          %827 = sbr.rel (%p825) target = $region36
        $region35: #{tpu_custom_call.1} parent=31 // pred_region
          %s828 = smul.u32 2, %s22
          %830 = vsyncadd %s821, 0
          %s831 = smul.addr %s21, 2
          %s832 = sadd.s32 %s828, %s831
          %s833 = smul.addr %s832, 8
          %s834 = scalar_lea.hbm %s3, %s833
          %s835 = sshll.u32 %s824, 4
          %s836 = int_to_ptr.vmem [resolvable:$true] %s835
          %s837 = sshll.u32 %s834, 4
          %s838 = int_to_ptr.hbm [resolvable:$true] %s837
          %843 = dma.vmem_to_hbm [thread:$0]  %s836, 256, %s838, %s821, 128, 128, 8
        $region36: #{tpu_custom_call.1} parent=31 // pred_fallthru
          _
      $region32: #{tpu_custom_call.1} parent=5 // pred_fallthru
        _
      %p844 = scmp.le.s32.totalorder 2, %s12
      // Predicated region
      $region37: #{tpu_custom_call.1} parent=5 // pred_check
        %p845 = pneg %p844
      $region38: #{tpu_custom_call.1} parent=5 // pred_check_branch
        %847 = sbr.rel (%p845) target = $region40
      $region39: #{tpu_custom_call.1} parent=5 // pred_region
        %s848 = ssub.s32 %s12, 2
        // Predicated region
        $region41: #{tpu_custom_call.1} parent=39 // pred_check
          %p849 = pneg %p135
        $region42: #{tpu_custom_call.1} parent=39 // pred_check_branch
          %851 = sbr.rel (%p849) target = $region44
        $region43: #{tpu_custom_call.1} parent=39 // pred_region
          %s852 = sand.u32 %s120, 1
          %s853 = scalar_lea.sflag [#allocation3], %s852
          %s854 = sand.u32 %s120, 1
          %s855 = smul.addr %s854, 16
          %s856 = scalar_lea.vmem [#allocation2], %s855
          %858 = dma.done %s853, 256
        $region44: #{tpu_custom_call.1} parent=39 // pred_fallthru
          _
      $region40: #{tpu_custom_call.1} parent=5 // pred_fallthru
        _
    $region6: #{tpu_custom_call.1} parent=1 // loop_footer
      %s16 = sadd.s32 1, %s12
    $region7: #{tpu_custom_call.1} parent=1 // loop_footer_branch
      %11 = sbr.rel target = $region3
    $region8: #{tpu_custom_call.1} parent=1 // loop_exit
      _
    %859 = vsyncpa [#allocation3], 1
    %s860 = scalar_lea.sflag [#allocation3], 1
    %861 = vsyncpa %s860, 1

</llo_original>
